<compile_context>
chip_gen: v7x
topology: tpu7x:2x2x1
jax: 0.10.0
libtpu: 0.0.40
codegen_flags: <defaults>
</compile_context>

<pallas_src>
import jax
import jax.numpy as jnp
from jax.experimental import pallas as pl
from jax.experimental.pallas import tpu as pltpu


def se_kernel(x_ref, ones_ref, w1t_ref, w2t_ref, o_ref):
    # x_ref block: (Bt, C, HW); ones_ref: (HW, 1) in x.dtype;
    # w1t_ref: (C, hidden) f32 with 1/HW folded in; w2t_ref: (hidden, C) f32.
    x = x_ref[...]                                              # (Bt, C, HW)
    bt, c, hw = x.shape

    # --- Squeeze: spatial sum per (sample, channel), accumulated in f32.
    # The mean's 1/HW is folded into w1t (exact for power-of-two HW).
    if x.dtype == jnp.float32 or (c % 8 != 0):
        # f32 inputs: plain lane reduction, no widening copy of the tile.
        pooled = jnp.sum(x, axis=-1, dtype=jnp.float32)         # (Bt, C)
    else:
        # bf16/low-precision inputs: do the lane reduction on the (otherwise
        # idle) MXU against a ones column -> native f32 accumulation, no f32
        # copy of the tile, and no XLU rotate+add chain (v7x concern).
        pooled = jnp.dot(x.reshape(bt * c, hw), ones_ref[...],
                         preferred_element_type=jnp.float32)     # (Bt*C, 1)
        pooled = pooled.reshape(bt, c)

    # --- Excitation: two tiny bias-free linears batched over the Bt samples
    # (weights pre-transposed and pre-cast to f32 in the wrapper).
    h = jnp.maximum(
        jnp.dot(pooled, w1t_ref[...], preferred_element_type=jnp.float32),
        0.0)                                                     # (Bt, hidden)
    gate = jax.nn.sigmoid(
        jnp.dot(h, w2t_ref[...], preferred_element_type=jnp.float32))  # (Bt, C)

    # --- Scale: broadcast the per-channel gate over the spatial (lane) axis;
    # single pass over the tile, lane-dense store for HW % 128 == 0.
    o_ref[...] = x * gate[:, :, None].astype(x.dtype)


def se_layer(x, w1, w2, *, target_block_bytes=2 * 1024 * 1024, min_steps=6):
    """x: (B, C, H, W); w1: (C//r, C); w2: (C, C//r) (PyTorch Linear layout)."""
    B, C, H, W = x.shape
    HW = H * W
    hidden = w1.shape[0]
    x2 = x.reshape(B, C, HW)

    # ---- Block / grid selection ------------------------------------------
    bytes_per_sample = C * HW * x.dtype.itemsize
    # Samples per block under the ~2 MiB roofline-plateau budget.
    cap = max(1, target_block_bytes // bytes_per_sample)
    # Pipeline depth: at least min_steps grid steps (when B allows), never
    # fewer than needed to respect the block-size cap.
    steps = max(min_steps, pl.cdiv(B, cap))
    steps += steps % 2                 # even grid -> balanced on v7x's 2 TCs
    steps = max(1, min(steps, B))      # never schedule fully-empty blocks
    Bt = pl.cdiv(B, steps)
    steps = pl.cdiv(B, Bt)             # final grid extent (tail block masked)
    block_bytes = Bt * bytes_per_sample

    # Explicit VMEM limit: in+out double-buffered blocks + weights + slack.
    # v5e's default scoped limit is only 16 MiB; cap well under v7x's 64 MiB.
    vmem_limit = int(min(48 * 1024 * 1024,
                         max(16 * 1024 * 1024, 8 * block_bytes)))

    # Hoisted (one-time) weight prep: transpose, cast to f32, fold the mean's
    # 1/HW into the first linear (exact for power-of-two HW, negligible else).
    w1t = w1.T.astype(jnp.float32) * (1.0 / HW)   # (C, hidden)
    w2t = w2.T.astype(jnp.float32)                # (hidden, C)
    ones_col = jnp.ones((HW, 1), dtype=x.dtype)   # MXU-pooling column (bf16 path)

    out = pl.pallas_call(
        se_kernel,
        out_shape=jax.ShapeDtypeStruct((B, C, HW), x.dtype),
        grid=(steps,),
        in_specs=[
            pl.BlockSpec((Bt, C, HW), lambda b: (b, 0, 0)),
            pl.BlockSpec((HW, 1), lambda b: (0, 0)),
            pl.BlockSpec((C, hidden), lambda b: (0, 0)),
            pl.BlockSpec((hidden, C), lambda b: (0, 0)),
        ],
        out_specs=pl.BlockSpec((Bt, C, HW), lambda b: (b, 0, 0)),
        compiler_params=pltpu.CompilerParams(
            dimension_semantics=("parallel",),
            vmem_limit_bytes=vmem_limit,
        ),
    )(x2, ones_col, w1t, w2t)

    return out.reshape(B, C, H, W)


def se_layer_ref(x, w1, w2):
    """Pure-JAX reference identical to the PyTorch forward."""
    y = jnp.mean(x, axis=(2, 3))                 # (B, C)
    y = jnp.maximum(y @ w1.T, 0.0)               # (B, C//r)
    y = jax.nn.sigmoid(y @ w2.T)                 # (B, C)
    return x * y[:, :, None, None]


if __name__ == "__main__":
    # Small shapes consistent with the module: channel=64, reduction=16,
    # H=W=16 so the trailing spatial dim (HW=256) is lane-dense.
    B, C, H, W = 4, 64, 16, 16
    reduction = 16
    hidden = C // reduction                      # 4

    key = jax.random.PRNGKey(0)
    kx, k1, k2 = jax.random.split(key, 3)
    x = jax.random.normal(kx, (B, C, H, W), dtype=jnp.float32)
    # Deterministic synthetic weights (PyTorch Linear layout: (out, in))
    w1 = 0.1 * jax.random.normal(k1, (hidden, C), dtype=jnp.float32)
    w2 = 0.1 * jax.random.normal(k2, (C, hidden), dtype=jnp.float32)

    out = se_layer(x, w1, w2)
    jax.block_until_ready(out)

    ref = se_layer_ref(x, w1, w2)
    assert out.shape == (B, C, H, W)
    assert jnp.allclose(out, ref, atol=1e-5, rtol=1e-5), "mismatch vs reference"

    print("KERNEL_OK")
</pallas_src>

<mosaic_0001>
module attributes {stable_mosaic.version = 11 : i64} {
  func.func @se_kernel(%arg0: i32, %arg1: memref<1x64x256xf32, #tpu.memory_space<vmem>>, %arg2: memref<256x1xf32, #tpu.memory_space<vmem>>, %arg3: memref<64x4xf32, #tpu.memory_space<vmem>>, %arg4: memref<4x64xf32, #tpu.memory_space<vmem>>, %arg5: memref<1x64x256xf32, #tpu.memory_space<vmem>>) attributes {dimension_semantics = [#tpu.dimension_semantics<parallel>], iteration_bounds = array<i64: 4>, scalar_prefetch = 0 : i64, scratch_operands = 0 : i64, tpu.core_type = #tpu.core_type<tc>, window_params = [{transform_indices = @transform_0, window_bounds = array<i64: 1, 64, 256>}, {pipeline_mode = #tpu.pipeline_mode<synchronous>, transform_indices = @transform_1, window_bounds = array<i64: 256, 1>}, {pipeline_mode = #tpu.pipeline_mode<synchronous>, transform_indices = @transform_2, window_bounds = array<i64: 64, 4>}, {pipeline_mode = #tpu.pipeline_mode<synchronous>, transform_indices = @transform_3, window_bounds = array<i64: 4, 64>}, {transform_indices = @transform_4, window_bounds = array<i64: 1, 64, 256>}]} {
    %c0 = arith.constant 0 : index
    %c0_0 = arith.constant 0 : index
    %c0_1 = arith.constant 0 : index
    %0 = vector.load %arg1[%c0, %c0_0, %c0_1] : memref<1x64x256xf32, #tpu.memory_space<vmem>>, vector<1x64x256xf32>
    %cst = arith.constant dense<0.000000e+00> : vector<1x64xf32>
    %1 = vector.multi_reduction <add>, %0, %cst [2] : vector<1x64x256xf32> to vector<1x64xf32>
    %c0_2 = arith.constant 0 : index
    %c0_3 = arith.constant 0 : index
    %2 = vector.load %arg3[%c0_2, %c0_3] : memref<64x4xf32, #tpu.memory_space<vmem>>, vector<64x4xf32>
    %cst_4 = arith.constant dense<0.000000e+00> : vector<1x4xf32>
    %3 = tpu.matmul %1, %2, %cst_4 {dimension_numbers = #tpu.dot_dimension_numbers<[1], [0], [0], [1], [0, 0, 1, 1], [], []>} : vector<1x64xf32>, vector<64x4xf32>, vector<1x4xf32> -> vector<1x4xf32>
    %cst_5 = arith.constant 0.000000e+00 : f32
    %4 = vector.broadcast %cst_5 : f32 to vector<1x4xf32>
    %5 = arith.maximumf %3, %4 : vector<1x4xf32>
    %c0_6 = arith.constant 0 : index
    %c0_7 = arith.constant 0 : index
    %6 = vector.load %arg4[%c0_6, %c0_7] : memref<4x64xf32, #tpu.memory_space<vmem>>, vector<4x64xf32>
    %cst_8 = arith.constant dense<0.000000e+00> : vector<1x64xf32>
    %7 = tpu.matmul %5, %6, %cst_8 {dimension_numbers = #tpu.dot_dimension_numbers<[1], [0], [0], [1], [0, 0, 1, 1], [], []>} : vector<1x4xf32>, vector<4x64xf32>, vector<1x64xf32> -> vector<1x64xf32>
    %8 = arith.negf %7 : vector<1x64xf32>
    %9 = math.exp %8 : vector<1x64xf32>
    %cst_9 = arith.constant 1.000000e+00 : f32
    %10 = vector.broadcast %cst_9 : f32 to vector<1x64xf32>
    %11 = arith.addf %10, %9 : vector<1x64xf32>
    %12 = arith.divf %10, %11 : vector<1x64xf32>
    %13 = vector.shape_cast %12 : vector<1x64xf32> to vector<1x64x1xf32>
    %14 = vector.broadcast %13 : vector<1x64x1xf32> to vector<1x64x256xf32>
    %15 = arith.mulf %0, %14 : vector<1x64x256xf32>
    %c0_10 = arith.constant 0 : index
    %c0_11 = arith.constant 0 : index
    %c0_12 = arith.constant 0 : index
    %16 = vector.load %arg5[%c0_10, %c0_11, %c0_12] : memref<1x64x256xf32, #tpu.memory_space<vmem>>, vector<1x64x256xf32>
    tpu.vector_store %arg5[%c0_10, %c0_11, %c0_12], %15 {strides = array<i32>} : memref<1x64x256xf32, #tpu.memory_space<vmem>>, vector<1x64x256xf32>,
    return
  }
  func.func @transform_0(%arg0: i32) -> (i32, i32, i32) {
    %c0_i32 = arith.constant 0 : i32
    %c0_i32_0 = arith.constant 0 : i32
    %c0_i32_1 = arith.constant 0 : i32
    return %arg0, %c0_i32, %c0_i32_0 : i32, i32, i32
  }
  func.func @transform_1(%arg0: i32) -> (i32, i32) {
    %c0_i32 = arith.constant 0 : i32
    %c0_i32_0 = arith.constant 0 : i32
    %c0_i32_1 = arith.constant 0 : i32
    return %c0_i32, %c0_i32_0 : i32, i32
  }
  func.func @transform_2(%arg0: i32) -> (i32, i32) {
    %c0_i32 = arith.constant 0 : i32
    %c0_i32_0 = arith.constant 0 : i32
    %c0_i32_1 = arith.constant 0 : i32
    return %c0_i32, %c0_i32_0 : i32, i32
  }
  func.func @transform_3(%arg0: i32) -> (i32, i32) {
    %c0_i32 = arith.constant 0 : i32
    %c0_i32_0 = arith.constant 0 : i32
    %c0_i32_1 = arith.constant 0 : i32
    return %c0_i32, %c0_i32_0 : i32, i32
  }
  func.func @transform_4(%arg0: i32) -> (i32, i32, i32) {
    %c0_i32 = arith.constant 0 : i32
    %c0_i32_0 = arith.constant 0 : i32
    %c0_i32_1 = arith.constant 0 : i32
    return %arg0, %c0_i32, %c0_i32_0 : i32, i32, i32
  }
}

</mosaic_0001>

<llo_original>
// kernel: tpu_custom_call.1
$region0: #{tpu_custom_call.1}
  #allocation0 [shape = 'u32[]', space=smem, size = 0x4, offset = 0x4, fixed_abs, tag = 'smem constant byte address 0x4 - core index']
  #allocation1 [shape = 'u32[144,128]{1,0:T(1,128)}', space=vmem, size = 0x12000, scoped, tag = 'internal scratch']
  %s0 = inlined_call_operand.hbm [shape: f32[4,64,256], index: 0, kind: input, shape index: {}]
  %s1 = inlined_call_operand.vmem [shape: f32[256,1], index: 1, kind: input, shape index: {}]
  %s2 = inlined_call_operand.vmem [shape: f32[64,4], index: 2, kind: input, shape index: {}]
  %s3 = inlined_call_operand.vmem [shape: f32[4,64], index: 3, kind: input, shape index: {}]
  %s4 = inlined_call_operand.hbm [shape: f32[4,64,256], index: 4, kind: output, shape index: {}]
  %s5 = sld [smem:[#allocation0]]
  $region53: #{tpu_custom_call.1} parent=0
    _
  %s7 = ssub.s32 1, %s5
  %s8 = scalar_select 0, %s7, %s5
  $region1: #{tpu_custom_call.1} parent=0
    #allocation2 [shape = 'u8[131072]{0}', space=vmem, size = 0x20000, scoped, tag = 'input window, operand 0']
    #allocation3 [shape = 's32[2]{0}', space=sflag, size = 0x8, scoped, tag = 'scoped memory for tpu_custom_call.1']
    #allocation4 [shape = 's32[2]{0}', space=sflag, size = 0x8, scoped, tag = 'scoped memory for tpu_custom_call.1']
    #allocation5 [shape = 'u8[131072]{0}', space=vmem, size = 0x20000, scoped, tag = 'output window, operand 0']
    %9 = vsyncpa [#allocation3], 0
    %s10 = scalar_lea.sflag [#allocation3], 1
    %11 = vsyncpa %s10, 0
    %12 = vsyncpa [#allocation4], 0
    %s13 = scalar_lea.sflag [#allocation4], 1
    %14 = vsyncpa %s13, 0
    loop: start=0, step=1, limit=6
    $region2: #{tpu_custom_call.1} parent=1 // loop_pre_header
      _
    $region3: #{tpu_custom_call.1} parent=1 // loop_header
      %s16 = sphi 0, %s20
      %p17 = scmp.ge.s32.totalorder %s16, 6
      %s26 = sphi 0, %s28
      %s29 = sphi 0, %s26
      %s30 = sphi 0, %s29
      %s46 = sphi 0, %s30
      %s50 = sphi 0, %s50
      %s52 = sphi 0, %s50
      %s53 = sphi 0, %s52
      %s67 = sphi 0, %s53
      %s71 = sphi 0, %s71
      %s73 = sphi 0, %s71
      %s74 = sphi 0, %s73
      %s88 = sphi 0, %s74
      %s92 = sphi 0, %s92
      %s94 = sphi 0, %s92
      %s95 = sphi 0, %s94
      %s109 = sphi 0, %s95
      %s115 = sphi 0, %s117
      %s118 = sphi 0, %s115
      %s119 = sphi 0, %s118
      %s135 = sphi 0, %s119
    $region4: #{tpu_custom_call.1} parent=1 // loop_header_branch
      %19 = sbr.rel (%p17) target = $region8
    $region5: #{tpu_custom_call.1} parent=1 // loop_body
      %s21 = ssub.s32 %s16, 1
      %s22 = ssub.s32 %s16, 2
      %s23 = sadd.s32 %s16, 1
      %s24 = ssub.s32 %s16, %s23
      %p25 = scmp.eq.s32.totalorder %s24, 0
      %s27 = sadd.s32 %s26, 1
      %s28 = scalar_select %p25, %s26, %s27
      %p31 = pneg %p25
      %p32 = scmp.eq.s32.totalorder %s16, 3
      %p33 = por %p31, %p32
      %p34 = scmp.ne.s32.totalorder %s26, %s29
      %p35 = scmp.eq.s32.totalorder %s16, 0
      %p36 = por %p34, %p35
      %p37 = scmp.ne.s32.totalorder %s26, %s29
      %p38 = scmp.eq.s32.totalorder %s21, 3
      %p39 = por %p37, %p38
      %p40 = scmp.ne.s32.totalorder %s29, %s30
      %p41 = scmp.eq.s32.totalorder %s21, 0
      %p42 = por %p40, %p41
      %p43 = scmp.ne.s32.totalorder %s29, %s30
      %p44 = scmp.eq.s32.totalorder %s22, 3
      %p45 = por %p43, %p44
      %p47 = scmp.ne.s32.totalorder %s30, %s46
      %p48 = scmp.eq.s32.totalorder %s22, 0
      %p49 = por %p47, %p48
      %s51 = sadd.s32 %s50, 1
      %p54 = scmp.eq.s32.totalorder %s16, 3
      %p55 = scmp.ne.s32.totalorder %s50, %s52
      %p56 = scmp.eq.s32.totalorder %s16, 0
      %p57 = por %p55, %p56
      %p58 = scmp.ne.s32.totalorder %s50, %s52
      %p59 = scmp.eq.s32.totalorder %s21, 3
      %p60 = por %p58, %p59
      %p61 = scmp.ne.s32.totalorder %s52, %s53
      %p62 = scmp.eq.s32.totalorder %s21, 0
      %p63 = por %p61, %p62
      %p64 = scmp.ne.s32.totalorder %s52, %s53
      %p65 = scmp.eq.s32.totalorder %s22, 3
      %p66 = por %p64, %p65
      %p68 = scmp.ne.s32.totalorder %s53, %s67
      %p69 = scmp.eq.s32.totalorder %s22, 0
      %p70 = por %p68, %p69
      %s72 = sadd.s32 %s71, 1
      %p75 = scmp.eq.s32.totalorder %s16, 3
      %p76 = scmp.ne.s32.totalorder %s71, %s73
      %p77 = scmp.eq.s32.totalorder %s16, 0
      %p78 = por %p76, %p77
      %p79 = scmp.ne.s32.totalorder %s71, %s73
      %p80 = scmp.eq.s32.totalorder %s21, 3
      %p81 = por %p79, %p80
      %p82 = scmp.ne.s32.totalorder %s73, %s74
      %p83 = scmp.eq.s32.totalorder %s21, 0
      %p84 = por %p82, %p83
      %p85 = scmp.ne.s32.totalorder %s73, %s74
      %p86 = scmp.eq.s32.totalorder %s22, 3
      %p87 = por %p85, %p86
      %p89 = scmp.ne.s32.totalorder %s74, %s88
      %p90 = scmp.eq.s32.totalorder %s22, 0
      %p91 = por %p89, %p90
      %s93 = sadd.s32 %s92, 1
      %p96 = scmp.eq.s32.totalorder %s16, 3
      %p97 = scmp.ne.s32.totalorder %s92, %s94
      %p98 = scmp.eq.s32.totalorder %s16, 0
      %p99 = por %p97, %p98
      %p100 = scmp.ne.s32.totalorder %s92, %s94
      %p101 = scmp.eq.s32.totalorder %s21, 3
      %p102 = por %p100, %p101
      %p103 = scmp.ne.s32.totalorder %s94, %s95
      %p104 = scmp.eq.s32.totalorder %s21, 0
      %p105 = por %p103, %p104
      %p106 = scmp.ne.s32.totalorder %s94, %s95
      %p107 = scmp.eq.s32.totalorder %s22, 3
      %p108 = por %p106, %p107
      %p110 = scmp.ne.s32.totalorder %s95, %s109
      %p111 = scmp.eq.s32.totalorder %s22, 0
      %p112 = por %p110, %p111
      %s113 = ssub.s32 %s16, %s23
      %p114 = scmp.eq.s32.totalorder %s113, 0
      %s116 = sadd.s32 %s115, 1
      %s117 = scalar_select %p114, %s115, %s116
      %p120 = pneg %p114
      %p121 = scmp.eq.s32.totalorder %s16, 3
      %p122 = por %p120, %p121
      %p123 = scmp.ne.s32.totalorder %s115, %s118
      %p124 = scmp.eq.s32.totalorder %s16, 0
      %p125 = por %p123, %p124
      %p126 = scmp.ne.s32.totalorder %s115, %s118
      %p127 = scmp.eq.s32.totalorder %s21, 3
      %p128 = por %p126, %p127
      %p129 = scmp.ne.s32.totalorder %s118, %s119
      %p130 = scmp.eq.s32.totalorder %s21, 0
      %p131 = por %p129, %p130
      %p132 = scmp.ne.s32.totalorder %s118, %s119
      %p133 = scmp.eq.s32.totalorder %s22, 3
      %p134 = por %p132, %p133
      %p136 = scmp.ne.s32.totalorder %s119, %s135
      %p137 = scmp.eq.s32.totalorder %s22, 0
      %p138 = por %p136, %p137
      %p139 = scmp.le.s32.totalorder 1, %s16
      %p140 = scmp.lt.s32.totalorder %s16, 5
      %p141 = pnand %p139, %p140
      %p142 = pneg %p141
      // Predicated region
      $region9: #{tpu_custom_call.1} parent=5 // pred_check
        _
      $region10: #{tpu_custom_call.1} parent=5 // pred_check_branch
        %144 = sbr.rel (%p141) target = $region12
      $region11: #{tpu_custom_call.1} parent=5 // pred_region
        %s145 = ssub.s32 %s16, 1
        // Predicated region
        $region13: #{tpu_custom_call.1} parent=11 // pred_check
          %p146 = pneg %p63
        $region14: #{tpu_custom_call.1} parent=11 // pred_check_branch
          %148 = sbr.rel (%p146) target = $region16
        $region15: #{tpu_custom_call.1} parent=11 // pred_region
          _
        $region16: #{tpu_custom_call.1} parent=11 // pred_fallthru
          _
        // Predicated region
        $region17: #{tpu_custom_call.1} parent=11 // pred_check
          %p149 = pneg %p84
        $region18: #{tpu_custom_call.1} parent=11 // pred_check_branch
          %151 = sbr.rel (%p149) target = $region20
        $region19: #{tpu_custom_call.1} parent=11 // pred_region
          _
        $region20: #{tpu_custom_call.1} parent=11 // pred_fallthru
          _
        // Predicated region
        $region21: #{tpu_custom_call.1} parent=11 // pred_check
          %p152 = pneg %p105
        $region22: #{tpu_custom_call.1} parent=11 // pred_check_branch
          %154 = sbr.rel (%p152) target = $region24
        $region23: #{tpu_custom_call.1} parent=11 // pred_region
          _
        $region24: #{tpu_custom_call.1} parent=11 // pred_fallthru
          _
      $region12: #{tpu_custom_call.1} parent=5 // pred_fallthru
        _
      %p155 = scmp.lt.s32.totalorder %s16, 4
      // Predicated region
      $region25: #{tpu_custom_call.1} parent=5 // pred_check
        %p156 = pneg %p155
      $region26: #{tpu_custom_call.1} parent=5 // pred_check_branch
        %158 = sbr.rel (%p156) target = $region28
      $region27: #{tpu_custom_call.1} parent=5 // pred_region
        // Predicated region
        $region29: #{tpu_custom_call.1} parent=27 // pred_check
          %p159 = pneg %p36
        $region30: #{tpu_custom_call.1} parent=27 // pred_check_branch
          %161 = sbr.rel (%p159) target = $region32
        $region31: #{tpu_custom_call.1} parent=27 // pred_region
          %s162 = sand.u32 %s26, 1
          %s163 = scalar_lea.sflag [#allocation3], %s162
          %s164 = sand.u32 %s26, 1
          %s165 = smul.addr %s164, 128
          %s166 = scalar_lea.vmem [#allocation2], %s165
          %s168 = ssub.s32 2048, 2048
          %169 = vsyncadd %s163, %s168
          %s170 = smul.addr %s16, 16
          %s171 = smul.addr %s170, 128
          %s172 = scalar_lea.hbm %s0, %s171
          %s173 = sshll.u32 %s166, 4
          %s174 = int_to_ptr.vmem [resolvable:$true] %s173
          %179 = dma.hbm_to_vmem [thread:$0]  %s172, 2048, %s174, %s163, 256, 256, 16
        $region32: #{tpu_custom_call.1} parent=27 // pred_fallthru
          _
      $region28: #{tpu_custom_call.1} parent=5 // pred_fallthru
        _
      %p180 = scmp.le.s32.totalorder 1, %s16
      %p181 = scmp.lt.s32.totalorder %s16, 5
      %p182 = pnand %p180, %p181
      %p183 = pneg %p182
      // Predicated region
      $region33: #{tpu_custom_call.1} parent=5 // pred_check
        _
      $region34: #{tpu_custom_call.1} parent=5 // pred_check_branch
        %185 = sbr.rel (%p182) target = $region36
      $region35: #{tpu_custom_call.1} parent=5 // pred_region
        %s186 = ssub.s32 %s16, 1
        %s187 = sand.u32 %s29, 1
        %s188 = scalar_lea.sflag [#allocation3], %s187
        %s189 = sand.u32 %s29, 1
        %s190 = smul.addr %s189, 128
        %s191 = scalar_lea.vmem [#allocation2], %s190
        // Predicated region
        $region37: #{tpu_custom_call.1} parent=35 // pred_check
          %p192 = pneg %p42
        $region38: #{tpu_custom_call.1} parent=35 // pred_check_branch
          %194 = sbr.rel (%p192) target = $region40
        $region39: #{tpu_custom_call.1} parent=35 // pred_region
          %195 = dma.done %s188, 2048
        $region40: #{tpu_custom_call.1} parent=35 // pred_fallthru
          _
        %s196 = sand.u32 %s29, 1
        %s197 = scalar_lea.sflag [#allocation3], %s196
        %s198 = sand.u32 %s29, 1
        %s199 = smul.addr %s198, 128
        %s200 = scalar_lea.vmem [#allocation2], %s199
        %p201 = pneg %p42
        %p202 = pneg %p39
        %p203 = pneg %p63
        %p204 = pneg %p60
        %p205 = pneg %p84
        %p206 = pneg %p81
        %p207 = pneg %p105
        %p208 = pneg %p102
        %p209 = pneg %p131
        %p210 = pneg %p128
        %s211 = sand.u32 %s118, 1
        %s212 = scalar_lea.sflag [#allocation4], %s211
        %s213 = sand.u32 %s118, 1
        %s214 = smul.addr %s213, 128
        %s215 = scalar_lea.vmem [#allocation5], %s214
        %v216 = vld [vmem:[%s191] sm:$0xff]
        %v217 = vld [vmem:[%s191 + $0x8] sm:$0xff]
        %v218 = vld [vmem:[%s191 + $0x10] sm:$0xff]
        %v219 = vld [vmem:[%s191 + $0x18] sm:$0xff]
        %v220 = vld [vmem:[%s191 + $0x20] sm:$0xff]
        %v221 = vld [vmem:[%s191 + $0x28] sm:$0xff]
        %v222 = vld [vmem:[%s191 + $0x30] sm:$0xff]
        %v223 = vld [vmem:[%s191 + $0x38] sm:$0xff]
        %v224 = vld [vmem:[%s191 + $0x40] sm:$0xff]
        %v225 = vld [vmem:[%s191 + $0x48] sm:$0xff]
        %v226 = vld [vmem:[%s191 + $0x50] sm:$0xff]
        %v227 = vld [vmem:[%s191 + $0x58] sm:$0xff]
        %v228 = vld [vmem:[%s191 + $0x60] sm:$0xff]
        %v229 = vld [vmem:[%s191 + $0x68] sm:$0xff]
        %v230 = vld [vmem:[%s191 + $0x70] sm:$0xff]
        %v231 = vld [vmem:[%s191 + $0x78] sm:$0xff]
        %v232 = vadd.f32 %v216, %v217
        %233 = vadd.xlane.f32.xlu0 %v232
        %v234 = vpop.xlane.xlu0 %233
        %v235 = vadd.f32 %v218, %v219
        %236 = vadd.xlane.f32.xlu0 %v235
        %v237 = vpop.xlane.xlu0 %236
        %v238 = vadd.f32 %v220, %v221
        %239 = vadd.xlane.f32.xlu0 %v238
        %v240 = vpop.xlane.xlu0 %239
        %v241 = vadd.f32 %v222, %v223
        %242 = vadd.xlane.f32.xlu0 %v241
        %v243 = vpop.xlane.xlu0 %242
        %v244 = vadd.f32 %v224, %v225
        %245 = vadd.xlane.f32.xlu0 %v244
        %v246 = vpop.xlane.xlu0 %245
        %v247 = vadd.f32 %v226, %v227
        %248 = vadd.xlane.f32.xlu0 %v247
        %v249 = vpop.xlane.xlu0 %248
        %v250 = vadd.f32 %v228, %v229
        %251 = vadd.xlane.f32.xlu0 %v250
        %v252 = vpop.xlane.xlu0 %251
        %v253 = vadd.f32 %v230, %v231
        %254 = vadd.xlane.f32.xlu0 %v253
        %v255 = vpop.xlane.xlu0 %254
        %v256 = vld [vmem:[%s2] sm:$0xff]
        %v257 = vld [vmem:[%s2 + $0x8] sm:$0xff]
        %v258 = vld [vmem:[%s2 + $0x10] sm:$0xff]
        %v259 = vld [vmem:[%s2 + $0x18] sm:$0xff]
        %v260 = vld [vmem:[%s2 + $0x20] sm:$0xff]
        %v261 = vld [vmem:[%s2 + $0x28] sm:$0xff]
        %v262 = vld [vmem:[%s2 + $0x30] sm:$0xff]
        %v263 = vld [vmem:[%s2 + $0x38] sm:$0xff]
        %v272 = vlaneseq
        %v273 = vand.u32 %v272, 127
        %v274 = vlaneseq
        %v275 = vshrl.u32 %v274, 7
        %v276 = vsub.s32 %v273, %v275
        %v277 = vrot.slane %v234, %v276
        %v278 = vadd.s32 %v273, 4294967288
        %v279 = vlaneseq
        %v280 = vshrl.u32 %v279, 7
        %v281 = vsub.s32 %v278, %v280
        %v282 = vrot.slane %v237, %v281
        %vm283 = vcmask 130112
        %v284 = vsel %vm283, %v282, %v277
        %v285 = vadd.s32 %v273, 4294967280
        %v286 = vlaneseq
        %v287 = vshrl.u32 %v286, 7
        %v288 = vsub.s32 %v285, %v287
        %v289 = vrot.slane %v240, %v288
        %vm290 = vcmask 195712
        %v291 = vsel %vm290, %v289, %v284
        %v292 = vadd.s32 %v273, 4294967272
        %v293 = vlaneseq
        %v294 = vshrl.u32 %v293, 7
        %v295 = vsub.s32 %v292, %v294
        %v296 = vrot.slane %v243, %v295
        %vm297 = vcmask 261312
        %v298 = vsel %vm297, %v296, %v291
        %v299 = vadd.s32 %v273, 4294967264
        %v300 = vlaneseq
        %v301 = vshrl.u32 %v300, 7
        %v302 = vsub.s32 %v299, %v301
        %v303 = vrot.slane %v246, %v302
        %vm304 = vcmask 326912
        %v305 = vsel %vm304, %v303, %v298
        %v306 = vadd.s32 %v273, 4294967256
        %v307 = vlaneseq
        %v308 = vshrl.u32 %v307, 7
        %v309 = vsub.s32 %v306, %v308
        %v310 = vrot.slane %v249, %v309
        %vm311 = vcmask 392512
        %v312 = vsel %vm311, %v310, %v305
        %v313 = vadd.s32 %v273, 4294967248
        %v314 = vlaneseq
        %v315 = vshrl.u32 %v314, 7
        %v316 = vsub.s32 %v313, %v315
        %v317 = vrot.slane %v252, %v316
        %vm318 = vcmask 458112
        %v319 = vsel %vm318, %v317, %v312
        %v320 = vadd.s32 %v273, 4294967240
        %v321 = vlaneseq
        %v322 = vshrl.u32 %v321, 7
        %v323 = vsub.s32 %v320, %v322
        %v324 = vrot.slane %v255, %v323
        %vm325 = vcmask 523712
        %v326 = vsel %vm325, %v324, %v319
        %vm327 = vcmask 523264
        %v328 = vsel %vm327, %v326, 0
        %330 = vmatprep.subr.mxu0 0.0
        %331 = vmatpush1.msra.mxu0 %v256
        %332 = vmatprep.subr.mxu0 0.0
        %333 = vmatpush1.msra.mxu0 %v257
        %334 = vmatprep.subr.mxu0 0.0
        %335 = vmatpush1.msra.mxu0 %v258
        %336 = vmatprep.subr.mxu0 0.0
        %337 = vmatpush1.msra.mxu0 %v259
        %338 = vmatprep.subr.mxu0 0.0
        %339 = vmatpush1.msra.mxu0 %v260
        %340 = vmatprep.subr.mxu0 0.0
        %341 = vmatpush1.msra.mxu0 %v261
        %342 = vmatprep.subr.mxu0 0.0
        %343 = vmatpush1.msra.mxu0 %v262
        %344 = vmatprep.subr.mxu0 0.0
        %345 = vmatpush1.msra.mxu0 %v263
        %346 = vmatprep.subr.mxu0 0.0
        %347 = vmatpush1.msra.mxu0 0.0
        %348 = vmatprep.subr.mxu0 0.0
        %349 = vmatpush1.msra.mxu0 0.0
        %350 = vmatprep.subr.mxu0 0.0
        %351 = vmatpush1.msra.mxu0 0.0
        %352 = vmatprep.subr.mxu0 0.0
        %353 = vmatpush1.msra.mxu0 0.0
        %354 = vmatprep.subr.mxu0 0.0
        %355 = vmatpush1.msra.mxu0 0.0
        %356 = vmatprep.subr.mxu0 0.0
        %357 = vmatpush1.msra.mxu0 0.0
        %358 = vmatprep.subr.mxu0 0.0
        %359 = vmatpush1.msra.mxu0 0.0
        %360 = vmatprep.subr.mxu0 0.0
        %361 = vmatpush1.msra.mxu0 0.0
        %362 = vmatprep.subr.mxu0 0.0
        %363 = vmatpush1.msra.mxu0 0.0
        %364 = vmatprep.subr.mxu0 0.0
        %365 = vmatpush1.msra.mxu0 0.0
        %366 = vmatprep.subr.mxu0 0.0
        %367 = vmatpush1.msra.mxu0 0.0
        %368 = vmatprep.subr.mxu0 0.0
        %369 = vmatpush1.msra.mxu0 0.0
        %370 = vmatprep.subr.mxu0 0.0
        %371 = vmatpush1.msra.mxu0 0.0
        %372 = vmatprep.subr.mxu0 0.0
        %373 = vmatpush1.msra.mxu0 0.0
        %374 = vmatprep.subr.mxu0 0.0
        %375 = vmatpush1.msra.mxu0 0.0
        %376 = vmatprep.subr.mxu0 0.0
        %377 = vmatpush1.msra.mxu0 0.0
        %378 = vmatprep.subr.mxu0 0.0
        %379 = vmatpush1.msra.mxu0 0.0
        %380 = vmatprep.subr.mxu0 0.0
        %381 = vmatpush1.msra.mxu0 0.0
        %382 = vmatprep.subr.mxu0 0.0
        %383 = vmatpush1.msra.mxu0 0.0
        %384 = vmatprep.subr.mxu0 0.0
        %385 = vmatpush1.msra.mxu0 0.0
        %386 = vmatprep.subr.mxu0 0.0
        %387 = vmatpush1.msra.mxu0 0.0
        %388 = vmatprep.subr.mxu0 0.0
        %389 = vmatpush1.msra.mxu0 0.0
        %390 = vmatprep.subr.mxu0 0.0
        %391 = vmatpush1.msra.mxu0 0.0
        %392 = vmatprep.subr.mxu0 0.0
        %393 = vmatpush1.msra.mxu0 0.0
        %394 = vmatprep.mubr.f32.mxu0 0.0
        %395 = vmatmul.mubr.f32.gmra.mrb[0].mxu0 %v328
        %v396 = vpop.f32.mrb[0].mxu0
        %v397 = vadd.f32 0.0, %v396
        %v398 = vpop.f32.mrb[0].mxu0
        %399 = vdwg.mxu0
        %v400 = vmax.f32 %v397, 0.0
        %v401 = vld [vmem:[%s3] sm:$0xf]
        %vm402 = vcmask 31744
        %v404 = vsel %vm402, %v400, 0
        %vm406 = vcmask 1043456
        %v408 = vsel %vm406, %v401, 0
        %410 = vmatprep.subr.mxu0 0.0
        %411 = vmatpush1.msra.mxu0 %v408
        %412 = vmatprep.subr.mxu0 0.0
        %413 = vmatpush1.msra.mxu0 0.0
        %414 = vmatprep.subr.mxu0 0.0
        %415 = vmatpush1.msra.mxu0 0.0
        %416 = vmatprep.subr.mxu0 0.0
        %417 = vmatpush1.msra.mxu0 0.0
        %418 = vmatprep.subr.mxu0 0.0
        %419 = vmatpush1.msra.mxu0 0.0
        %420 = vmatprep.subr.mxu0 0.0
        %421 = vmatpush1.msra.mxu0 0.0
        %422 = vmatprep.subr.mxu0 0.0
        %423 = vmatpush1.msra.mxu0 0.0
        %424 = vmatprep.subr.mxu0 0.0
        %425 = vmatpush1.msra.mxu0 0.0
        %426 = vmatprep.subr.mxu0 0.0
        %427 = vmatpush1.msra.mxu0 0.0
        %428 = vmatprep.subr.mxu0 0.0
        %429 = vmatpush1.msra.mxu0 0.0
        %430 = vmatprep.subr.mxu0 0.0
        %431 = vmatpush1.msra.mxu0 0.0
        %432 = vmatprep.subr.mxu0 0.0
        %433 = vmatpush1.msra.mxu0 0.0
        %434 = vmatprep.subr.mxu0 0.0
        %435 = vmatpush1.msra.mxu0 0.0
        %436 = vmatprep.subr.mxu0 0.0
        %437 = vmatpush1.msra.mxu0 0.0
        %438 = vmatprep.subr.mxu0 0.0
        %439 = vmatpush1.msra.mxu0 0.0
        %440 = vmatprep.subr.mxu0 0.0
        %441 = vmatpush1.msra.mxu0 0.0
        %442 = vmatprep.subr.mxu0 0.0
        %443 = vmatpush1.msra.mxu0 0.0
        %444 = vmatprep.subr.mxu0 0.0
        %445 = vmatpush1.msra.mxu0 0.0
        %446 = vmatprep.subr.mxu0 0.0
        %447 = vmatpush1.msra.mxu0 0.0
        %448 = vmatprep.subr.mxu0 0.0
        %449 = vmatpush1.msra.mxu0 0.0
        %450 = vmatprep.subr.mxu0 0.0
        %451 = vmatpush1.msra.mxu0 0.0
        %452 = vmatprep.subr.mxu0 0.0
        %453 = vmatpush1.msra.mxu0 0.0
        %454 = vmatprep.subr.mxu0 0.0
        %455 = vmatpush1.msra.mxu0 0.0
        %456 = vmatprep.subr.mxu0 0.0
        %457 = vmatpush1.msra.mxu0 0.0
        %458 = vmatprep.subr.mxu0 0.0
        %459 = vmatpush1.msra.mxu0 0.0
        %460 = vmatprep.subr.mxu0 0.0
        %461 = vmatpush1.msra.mxu0 0.0
        %462 = vmatprep.subr.mxu0 0.0
        %463 = vmatpush1.msra.mxu0 0.0
        %464 = vmatprep.subr.mxu0 0.0
        %465 = vmatpush1.msra.mxu0 0.0
        %466 = vmatprep.subr.mxu0 0.0
        %467 = vmatpush1.msra.mxu0 0.0
        %468 = vmatprep.subr.mxu0 0.0
        %469 = vmatpush1.msra.mxu0 0.0
        %470 = vmatprep.subr.mxu0 0.0
        %471 = vmatpush1.msra.mxu0 0.0
        %472 = vmatprep.subr.mxu0 0.0
        %473 = vmatpush1.msra.mxu0 0.0
        %474 = vmatprep.mubr.f32.mxu0 0.0
        %475 = vmatmul.mubr.f32.gmra.mrb[0].mxu0 %v404
        %v476 = vpop.f32.mrb[0].mxu0
        %v477 = vadd.f32 0.0, %v476
        %v478 = vpop.f32.mrb[0].mxu0
        %479 = vdwg.mxu0
        %v480 = vxor.u32 %v477, 2147483648
        %v481 = vmul.f32 %v480, 1.442695
        %v482 = vpow.pop %v481
        %v483 = vadd.f32 %v482, 1.0
        %v484 = vrcp.pop %v483
        %v485 = vmul.f32 1.0, %v484
        %v486 = vlaneseq
        %v487 = vshrl.u32 %v486, 7
        %v488 = vsub.s32 0, %v487
        %v489 = vrot.slane %v485, %v488
        %491 = vbcast.lane.b32.xlu0 %v489, 256
        %v492 = vpop.permute.xlu0 %491
        %s494 = sor.u32 256, 8
        %495 = vbcast.lane.b32.xlu0 %v489, %s494
        %v496 = vpop.permute.xlu0 %495
        %s498 = sor.u32 256, 16
        %499 = vbcast.lane.b32.xlu0 %v489, %s498
        %v500 = vpop.permute.xlu0 %499
        %s502 = sor.u32 256, 24
        %503 = vbcast.lane.b32.xlu0 %v489, %s502
        %v504 = vpop.permute.xlu0 %503
        %s506 = sor.u32 256, 32
        %507 = vbcast.lane.b32.xlu0 %v489, %s506
        %v508 = vpop.permute.xlu0 %507
        %s510 = sor.u32 256, 40
        %511 = vbcast.lane.b32.xlu0 %v489, %s510
        %v512 = vpop.permute.xlu0 %511
        %s514 = sor.u32 256, 48
        %515 = vbcast.lane.b32.xlu0 %v489, %s514
        %v516 = vpop.permute.xlu0 %515
        %s518 = sor.u32 256, 56
        %519 = vbcast.lane.b32.xlu0 %v489, %s518
        %v520 = vpop.permute.xlu0 %519
        %v521 = vmul.f32 %v216, %v492
        %v522 = vmul.f32 %v217, %v492
        %v523 = vmul.f32 %v218, %v496
        %v524 = vmul.f32 %v219, %v496
        %v525 = vmul.f32 %v220, %v500
        %v526 = vmul.f32 %v221, %v500
        %v527 = vmul.f32 %v222, %v504
        %v528 = vmul.f32 %v223, %v504
        %v529 = vmul.f32 %v224, %v508
        %v530 = vmul.f32 %v225, %v508
        %v531 = vmul.f32 %v226, %v512
        %v532 = vmul.f32 %v227, %v512
        %v533 = vmul.f32 %v228, %v516
        %v534 = vmul.f32 %v229, %v516
        %v535 = vmul.f32 %v230, %v520
        %v536 = vmul.f32 %v231, %v520
        %537 = vst [vmem:[%s215] sm:$0xff] %v521
        %538 = vst [vmem:[%s215 + $0x8] sm:$0xff] %v522
        %539 = vst [vmem:[%s215 + $0x10] sm:$0xff] %v523
        %540 = vst [vmem:[%s215 + $0x18] sm:$0xff] %v524
        %541 = vst [vmem:[%s215 + $0x20] sm:$0xff] %v525
        %542 = vst [vmem:[%s215 + $0x28] sm:$0xff] %v526
        %543 = vst [vmem:[%s215 + $0x30] sm:$0xff] %v527
        %544 = vst [vmem:[%s215 + $0x38] sm:$0xff] %v528
        %545 = vst [vmem:[%s215 + $0x40] sm:$0xff] %v529
        %546 = vst [vmem:[%s215 + $0x48] sm:$0xff] %v530
        %547 = vst [vmem:[%s215 + $0x50] sm:$0xff] %v531
        %548 = vst [vmem:[%s215 + $0x58] sm:$0xff] %v532
        %549 = vst [vmem:[%s215 + $0x60] sm:$0xff] %v533
        %550 = vst [vmem:[%s215 + $0x68] sm:$0xff] %v534
        %551 = vst [vmem:[%s215 + $0x70] sm:$0xff] %v535
        %552 = vst [vmem:[%s215 + $0x78] sm:$0xff] %v536
        %s553 = sand.u32 %s118, 1
        %s554 = scalar_lea.sflag [#allocation4], %s553
        %s555 = sand.u32 %s118, 1
        %s556 = smul.addr %s555, 128
        %s557 = scalar_lea.vmem [#allocation5], %s556
        // Predicated region
        $region41: #{tpu_custom_call.1} parent=35 // pred_check
          %p558 = pneg %p128
        $region42: #{tpu_custom_call.1} parent=35 // pred_check_branch
          %560 = sbr.rel (%p558) target = $region44
        $region43: #{tpu_custom_call.1} parent=35 // pred_region
          %s562 = ssub.s32 2048, 2048
          %563 = vsyncadd %s554, %s562
          %s564 = smul.addr %s21, 16
          %s565 = smul.addr %s564, 128
          %s566 = scalar_lea.hbm %s4, %s565
          %s567 = sshll.u32 %s557, 4
          %s568 = int_to_ptr.vmem [resolvable:$true] %s567
          %573 = dma.vmem_to_hbm [thread:$0]  %s568, 2048, %s566, %s554, 256, 256, 16
        $region44: #{tpu_custom_call.1} parent=35 // pred_fallthru
          _
      $region36: #{tpu_custom_call.1} parent=5 // pred_fallthru
        _
      %p574 = scmp.le.s32.totalorder 2, %s16
      // Predicated region
      $region45: #{tpu_custom_call.1} parent=5 // pred_check
        %p575 = pneg %p574
      $region46: #{tpu_custom_call.1} parent=5 // pred_check_branch
        %577 = sbr.rel (%p575) target = $region48
      $region47: #{tpu_custom_call.1} parent=5 // pred_region
        %s578 = ssub.s32 %s16, 2
        // Predicated region
        $region49: #{tpu_custom_call.1} parent=47 // pred_check
          %p579 = pneg %p134
        $region50: #{tpu_custom_call.1} parent=47 // pred_check_branch
          %581 = sbr.rel (%p579) target = $region52
        $region51: #{tpu_custom_call.1} parent=47 // pred_region
          %s582 = sand.u32 %s119, 1
          %s583 = scalar_lea.sflag [#allocation4], %s582
          %s584 = sand.u32 %s119, 1
          %s585 = smul.addr %s584, 128
          %s586 = scalar_lea.vmem [#allocation5], %s585
          %587 = dma.done %s583, 2048
        $region52: #{tpu_custom_call.1} parent=47 // pred_fallthru
          _
      $region48: #{tpu_custom_call.1} parent=5 // pred_fallthru
        _
    $region6: #{tpu_custom_call.1} parent=1 // loop_footer
      %s20 = sadd.s32 1, %s16
    $region7: #{tpu_custom_call.1} parent=1 // loop_footer_branch
      %15 = sbr.rel target = $region3
    $region8: #{tpu_custom_call.1} parent=1 // loop_exit
      _
    %588 = vsyncpa [#allocation3], 1
    %s589 = scalar_lea.sflag [#allocation3], 1
    %590 = vsyncpa %s589, 1
    %591 = vsyncpa [#allocation4], 1
    %s592 = scalar_lea.sflag [#allocation4], 1
    %593 = vsyncpa %s592, 1

</llo_original>
